<compile_context>
chip_gen: v7x
topology: tpu7x:2x2x1
jax: 0.10.0
libtpu: 0.0.40
codegen_flags: <defaults>
</compile_context>

<pallas_src>
import functools

import jax
import jax.numpy as jnp
from jax.experimental import pallas as pl
from jax.experimental.pallas import tpu as pltpu


def sonar_dnn_kernel(x_ref, w1_ref, b1_ref, w2_ref, b2_ref, w3_ref, b3_ref, o_ref):
    # x_ref: (60, TB) activations, batch on lanes.  Weights are PyTorch layout
    # (out_features, in_features); biases are (out_features, 1) (broadcast over lanes).

    # Layer 1: Linear(60, 60) + ReLU            (Dropout = identity, eval mode)
    h1 = jnp.dot(w1_ref[...], x_ref[...], preferred_element_type=jnp.float32)
    h1 = jnp.maximum(h1 + b1_ref[...], 0.0)                       # f32 elementwise

    # Layer 2: Linear(60, 30) + ReLU            (Dropout = identity, eval mode)
    h2 = jnp.dot(w2_ref[...], h1.astype(w2_ref.dtype),
                 preferred_element_type=jnp.float32)
    h2 = jnp.maximum(h2 + b2_ref[...], 0.0)

    # Layer 3: Linear(30, 1) + Sigmoid -- with batch on lanes this is the
    # already-lane-dense (1, 30) @ (30, TB) matmul.
    logits = jnp.dot(w3_ref[...], h2.astype(w3_ref.dtype),
                     preferred_element_type=jnp.float32) + b3_ref[...]
    o_ref[...] = jax.nn.sigmoid(logits)                           # (1, TB), lane-dense


@functools.partial(jax.jit, static_argnames=("tb", "compute_dtype"))
def sonar_dnn(x, params, *, tb=2048, compute_dtype=jnp.float32):
    """x: (B, 60) float32. params: (w1, b1, w2, b2, w3, b3) in PyTorch layout."""
    w1, b1, w2, b2, w3, b3 = params
    B = x.shape[0]

    # Batch tile: multiple of 128 (batch is on the lane axis), no larger than
    # needed for small batches.  Default 2048 keeps double-buffered activations
    # well under v7x's 64 MiB VMEM while sitting on the HBM-roofline plateau.
    tb = max(128, min(tb, pl.cdiv(B, 128) * 128))
    b_pad = pl.cdiv(B, tb) * tb

    # Stream activations batch-on-lanes; pad the ragged tail with zeros (padded
    # output columns are simply sliced off below -- no cross-row reductions).
    x_t = jnp.pad(x, ((0, b_pad - B), (0, 0))).T.astype(compute_dtype)  # (60, b_pad)

    wp = lambda w: w.astype(compute_dtype)
    bp = lambda b: b.reshape(-1, 1).astype(jnp.float32)  # (out, 1), f32 elementwise

    const = lambda shape: pl.BlockSpec(shape, lambda i: (0, 0))  # VMEM-resident params

    out = pl.pallas_call(
        sonar_dnn_kernel,
        out_shape=jax.ShapeDtypeStruct((1, b_pad), jnp.float32),
        grid=(b_pad // tb,),
        in_specs=[
            pl.BlockSpec((60, tb), lambda i: (0, i)),   # activation stream (pipelined)
            const((60, 60)), const((60, 1)),            # w1, b1
            const((30, 60)), const((30, 1)),            # w2, b2
            const((1, 30)),  const((1, 1)),             # w3, b3
        ],
        out_specs=pl.BlockSpec((1, tb), lambda i: (0, i)),  # lane-dense output
        compiler_params=pltpu.CompilerParams(
            dimension_semantics=("parallel",)),             # megacore split on v7x
    )(x_t, wp(w1), bp(b1), wp(w2), bp(b2), wp(w3), bp(b3))

    return out[:, :B].T                                     # (B, 1)


def init_params(key):
    """PyTorch nn.Linear default init: U[-1/sqrt(fan_in), +1/sqrt(fan_in)].

    Weights in PyTorch layout (out_features, in_features); biases (out_features,)."""
    dims = [(60, 60), (60, 30), (30, 1)]
    params = []
    for fan_in, fan_out in dims:
        key, kw, kb = jax.random.split(key, 3)
        bound = 1.0 / jnp.sqrt(fan_in)
        w = jax.random.uniform(kw, (fan_out, fan_in), jnp.float32, -bound, bound)
        b = jax.random.uniform(kb, (fan_out,), jnp.float32, -bound, bound)
        params += [w, b]
    return tuple(params)


if __name__ == "__main__":
    key = jax.random.PRNGKey(0)
    key, kx = jax.random.split(key)
    B = 8  # small batch
    x = jax.random.normal(kx, (B, 60), jnp.float32)
    params = init_params(key)

    # Pure-JAX reference (PyTorch semantics: y = x @ W.T + b per layer).
    w1, b1, w2, b2, w3, b3 = params
    ref = jax.nn.sigmoid(
        jnp.maximum(jnp.maximum(x @ w1.T + b1, 0.0) @ w2.T + b2, 0.0) @ w3.T + b3
    )

    # f32 path: exact-semantics check.
    out = jax.block_until_ready(sonar_dnn(x, params))
    assert out.shape == (B, 1)
    assert jnp.allclose(out, ref, atol=1e-5, rtol=1e-5)

    # bf16 activation/weight streaming (halves HBM bytes on this mem-bound net);
    # accumulation + elementwise stay f32, so only a loose tolerance is needed.
    out_bf16 = jax.block_until_ready(sonar_dnn(x, params, compute_dtype=jnp.bfloat16))
    assert out_bf16.shape == (B, 1)
    assert jnp.allclose(out_bf16, ref, atol=2e-2, rtol=2e-2)

    # TODO(synk): training-mode Dropout (p=0.2) would require pltpu.prng_seed /
    # pltpu.prng_random_bits masking; eval-mode (identity) semantics implemented here.
    print("KERNEL_OK")
</pallas_src>

<mosaic_0001>
module attributes {stable_mosaic.version = 11 : i64} {
  func.func @sonar_dnn_kernel(%arg0: i32, %arg1: memref<60x128xf32, #tpu.memory_space<vmem>>, %arg2: memref<60x60xf32, #tpu.memory_space<vmem>>, %arg3: memref<60x1xf32, #tpu.memory_space<vmem>>, %arg4: memref<30x60xf32, #tpu.memory_space<vmem>>, %arg5: memref<30x1xf32, #tpu.memory_space<vmem>>, %arg6: memref<1x30xf32, #tpu.memory_space<vmem>>, %arg7: memref<1x1xf32, #tpu.memory_space<vmem>>, %arg8: memref<1x128xf32, #tpu.memory_space<vmem>>) attributes {dimension_semantics = [#tpu.dimension_semantics<parallel>], iteration_bounds = array<i64: 1>, scalar_prefetch = 0 : i64, scratch_operands = 0 : i64, tpu.core_type = #tpu.core_type<tc>, window_params = [{transform_indices = @transform_0, window_bounds = array<i64: 60, 128>}, {pipeline_mode = #tpu.pipeline_mode<synchronous>, transform_indices = @transform_1, window_bounds = array<i64: 60, 60>}, {pipeline_mode = #tpu.pipeline_mode<synchronous>, transform_indices = @transform_2, window_bounds = array<i64: 60, 1>}, {pipeline_mode = #tpu.pipeline_mode<synchronous>, transform_indices = @transform_3, window_bounds = array<i64: 30, 60>}, {pipeline_mode = #tpu.pipeline_mode<synchronous>, transform_indices = @transform_4, window_bounds = array<i64: 30, 1>}, {pipeline_mode = #tpu.pipeline_mode<synchronous>, transform_indices = @transform_5, window_bounds = array<i64: 1, 30>}, {pipeline_mode = #tpu.pipeline_mode<synchronous>, transform_indices = @transform_6, window_bounds = array<i64: 1, 1>}, {transform_indices = @transform_7, window_bounds = array<i64: 1, 128>}]} {
    %c0 = arith.constant 0 : index
    %c0_0 = arith.constant 0 : index
    %0 = vector.load %arg2[%c0, %c0_0] : memref<60x60xf32, #tpu.memory_space<vmem>>, vector<60x60xf32>
    %c0_1 = arith.constant 0 : index
    %c0_2 = arith.constant 0 : index
    %1 = vector.load %arg1[%c0_1, %c0_2] : memref<60x128xf32, #tpu.memory_space<vmem>>, vector<60x128xf32>
    %cst = arith.constant dense<0.000000e+00> : vector<60x128xf32>
    %2 = tpu.matmul %0, %1, %cst {dimension_numbers = #tpu.dot_dimension_numbers<[1], [0], [0], [1], [0, 0, 1, 1], [], []>} : vector<60x60xf32>, vector<60x128xf32>, vector<60x128xf32> -> vector<60x128xf32>
    %c0_3 = arith.constant 0 : index
    %c0_4 = arith.constant 0 : index
    %3 = vector.load %arg3[%c0_3, %c0_4] : memref<60x1xf32, #tpu.memory_space<vmem>>, vector<60x1xf32>
    %4 = vector.broadcast %3 : vector<60x1xf32> to vector<60x128xf32>
    %5 = arith.addf %2, %4 : vector<60x128xf32>
    %cst_5 = arith.constant 0.000000e+00 : f32
    %6 = vector.broadcast %cst_5 : f32 to vector<60x128xf32>
    %7 = arith.maximumf %5, %6 : vector<60x128xf32>
    %c0_6 = arith.constant 0 : index
    %c0_7 = arith.constant 0 : index
    %8 = vector.load %arg4[%c0_6, %c0_7] : memref<30x60xf32, #tpu.memory_space<vmem>>, vector<30x60xf32>
    %cst_8 = arith.constant dense<0.000000e+00> : vector<30x128xf32>
    %9 = tpu.matmul %8, %7, %cst_8 {dimension_numbers = #tpu.dot_dimension_numbers<[1], [0], [0], [1], [0, 0, 1, 1], [], []>} : vector<30x60xf32>, vector<60x128xf32>, vector<30x128xf32> -> vector<30x128xf32>
    %c0_9 = arith.constant 0 : index
    %c0_10 = arith.constant 0 : index
    %10 = vector.load %arg5[%c0_9, %c0_10] : memref<30x1xf32, #tpu.memory_space<vmem>>, vector<30x1xf32>
    %11 = vector.broadcast %10 : vector<30x1xf32> to vector<30x128xf32>
    %12 = arith.addf %9, %11 : vector<30x128xf32>
    %cst_11 = arith.constant 0.000000e+00 : f32
    %13 = vector.broadcast %cst_11 : f32 to vector<30x128xf32>
    %14 = arith.maximumf %12, %13 : vector<30x128xf32>
    %c0_12 = arith.constant 0 : index
    %c0_13 = arith.constant 0 : index
    %15 = vector.load %arg6[%c0_12, %c0_13] : memref<1x30xf32, #tpu.memory_space<vmem>>, vector<1x30xf32>
    %cst_14 = arith.constant dense<0.000000e+00> : vector<1x128xf32>
    %16 = tpu.matmul %15, %14, %cst_14 {dimension_numbers = #tpu.dot_dimension_numbers<[1], [0], [0], [1], [0, 0, 1, 1], [], []>} : vector<1x30xf32>, vector<30x128xf32>, vector<1x128xf32> -> vector<1x128xf32>
    %c0_15 = arith.constant 0 : index
    %c0_16 = arith.constant 0 : index
    %17 = vector.load %arg7[%c0_15, %c0_16] : memref<1x1xf32, #tpu.memory_space<vmem>>, vector<1x1xf32>
    %18 = vector.broadcast %17 : vector<1x1xf32> to vector<1x128xf32>
    %19 = arith.addf %16, %18 : vector<1x128xf32>
    %20 = arith.negf %19 : vector<1x128xf32>
    %21 = math.exp %20 : vector<1x128xf32>
    %cst_17 = arith.constant 1.000000e+00 : f32
    %22 = vector.broadcast %cst_17 : f32 to vector<1x128xf32>
    %23 = arith.addf %22, %21 : vector<1x128xf32>
    %24 = arith.divf %22, %23 : vector<1x128xf32>
    %c0_18 = arith.constant 0 : index
    %c0_19 = arith.constant 0 : index
    %25 = vector.load %arg8[%c0_18, %c0_19] : memref<1x128xf32, #tpu.memory_space<vmem>>, vector<1x128xf32>
    tpu.vector_store %arg8[%c0_18, %c0_19], %24 {strides = array<i32>} : memref<1x128xf32, #tpu.memory_space<vmem>>, vector<1x128xf32>,
    return
  }
  func.func @transform_0(%arg0: i32) -> (i32, i32) {
    %c0_i32 = arith.constant 0 : i32
    %c0_i32_0 = arith.constant 0 : i32
    return %c0_i32, %arg0 : i32, i32
  }
  func.func @transform_1(%arg0: i32) -> (i32, i32) {
    %c0_i32 = arith.constant 0 : i32
    %c0_i32_0 = arith.constant 0 : i32
    %c0_i32_1 = arith.constant 0 : i32
    return %c0_i32, %c0_i32_0 : i32, i32
  }
  func.func @transform_2(%arg0: i32) -> (i32, i32) {
    %c0_i32 = arith.constant 0 : i32
    %c0_i32_0 = arith.constant 0 : i32
    %c0_i32_1 = arith.constant 0 : i32
    return %c0_i32, %c0_i32_0 : i32, i32
  }
  func.func @transform_3(%arg0: i32) -> (i32, i32) {
    %c0_i32 = arith.constant 0 : i32
    %c0_i32_0 = arith.constant 0 : i32
    %c0_i32_1 = arith.constant 0 : i32
    return %c0_i32, %c0_i32_0 : i32, i32
  }
  func.func @transform_4(%arg0: i32) -> (i32, i32) {
    %c0_i32 = arith.constant 0 : i32
    %c0_i32_0 = arith.constant 0 : i32
    %c0_i32_1 = arith.constant 0 : i32
    return %c0_i32, %c0_i32_0 : i32, i32
  }
  func.func @transform_5(%arg0: i32) -> (i32, i32) {
    %c0_i32 = arith.constant 0 : i32
    %c0_i32_0 = arith.constant 0 : i32
    %c0_i32_1 = arith.constant 0 : i32
    return %c0_i32, %c0_i32_0 : i32, i32
  }
  func.func @transform_6(%arg0: i32) -> (i32, i32) {
    %c0_i32 = arith.constant 0 : i32
    %c0_i32_0 = arith.constant 0 : i32
    %c0_i32_1 = arith.constant 0 : i32
    return %c0_i32, %c0_i32_0 : i32, i32
  }
  func.func @transform_7(%arg0: i32) -> (i32, i32) {
    %c0_i32 = arith.constant 0 : i32
    %c0_i32_0 = arith.constant 0 : i32
    return %c0_i32, %arg0 : i32, i32
  }
}

</mosaic_0001>

<llo_original>
// kernel: sonar_dnn.1
$region0: #{sonar_dnn.1}
  #allocation0 [shape = 'u32[]', space=smem, size = 0x4, offset = 0x4, fixed_abs, tag = 'smem constant byte address 0x4 - core index']
  #allocation1 [shape = 'u32[144,128]{1,0:T(1,128)}', space=vmem, size = 0x12000, scoped, tag = 'internal scratch']
  #allocation2 [shape = 'f32[1,1]{1,0:T(1,128)S(1)}', space=vmem, size = 0x200, scoped, tag = 'scoped memory for sonar_dnn.1']
  %s0 = inlined_call_operand.vmem [shape: f32[60,128], index: 0, kind: input, shape index: {}]
  %s1 = inlined_call_operand.vmem [shape: f32[60,60], index: 1, kind: input, shape index: {}]
  %s2 = inlined_call_operand.vmem [shape: f32[60,1], index: 2, kind: input, shape index: {}]
  %s3 = inlined_call_operand.vmem [shape: f32[30,60], index: 3, kind: input, shape index: {}]
  %s4 = inlined_call_operand.vmem [shape: f32[30,1], index: 4, kind: input, shape index: {}]
  %s5 = inlined_call_operand.vmem [shape: f32[1,30], index: 5, kind: input, shape index: {}]
  %s6 = inlined_call_operand.<no memory space> [shape: f32[1,1], index: 6, kind: input, shape index: {}]
  %s7 = inlined_call_operand.vmem [shape: f32[1,128], index: 7, kind: output, shape index: {}]
  %s8 = sld [smem:[#allocation0]]
  $region38: #{sonar_dnn.1} parent=0
    _
  %s10 = ssub.s32 1, %s8
  %s11 = scalar_select 0, %s10, %s8
  %v12 = vstv %s6
  %13 = vst [vmem:[#allocation2] sm:$0x1] %v12
  // Predicated region
  $region2: #{sonar_dnn.1} parent=0 // pred_check
    _
  $region3: #{sonar_dnn.1} parent=0 // pred_check_branch
    %15 = sbr.rel (0) target = $region5
  $region4: #{sonar_dnn.1} parent=0 // pred_region
    _
  $region5: #{sonar_dnn.1} parent=0 // pred_fallthru
    _
  // Predicated region
  $region6: #{sonar_dnn.1} parent=0 // pred_check
    _
  $region7: #{sonar_dnn.1} parent=0 // pred_check_branch
    %17 = sbr.rel (0) target = $region9
  $region8: #{sonar_dnn.1} parent=0 // pred_region
    _
  $region9: #{sonar_dnn.1} parent=0 // pred_fallthru
    _
  // Predicated region
  $region10: #{sonar_dnn.1} parent=0 // pred_check
    _
  $region11: #{sonar_dnn.1} parent=0 // pred_check_branch
    %19 = sbr.rel (0) target = $region13
  $region12: #{sonar_dnn.1} parent=0 // pred_region
    _
  $region13: #{sonar_dnn.1} parent=0 // pred_fallthru
    _
  // Predicated region
  $region14: #{sonar_dnn.1} parent=0 // pred_check
    _
  $region15: #{sonar_dnn.1} parent=0 // pred_check_branch
    %21 = sbr.rel (0) target = $region17
  $region16: #{sonar_dnn.1} parent=0 // pred_region
    _
  $region17: #{sonar_dnn.1} parent=0 // pred_fallthru
    _
  // Predicated region
  $region18: #{sonar_dnn.1} parent=0 // pred_check
    _
  $region19: #{sonar_dnn.1} parent=0 // pred_check_branch
    %23 = sbr.rel (0) target = $region21
  $region20: #{sonar_dnn.1} parent=0 // pred_region
    _
  $region21: #{sonar_dnn.1} parent=0 // pred_fallthru
    _
  // Predicated region
  $region22: #{sonar_dnn.1} parent=0 // pred_check
    _
  $region23: #{sonar_dnn.1} parent=0 // pred_check_branch
    %25 = sbr.rel (0) target = $region25
  $region24: #{sonar_dnn.1} parent=0 // pred_region
    _
  $region25: #{sonar_dnn.1} parent=0 // pred_fallthru
    _
  // Predicated region
  $region26: #{sonar_dnn.1} parent=0 // pred_check
    _
  $region27: #{sonar_dnn.1} parent=0 // pred_check_branch
    %27 = sbr.rel (0) target = $region29
  $region28: #{sonar_dnn.1} parent=0 // pred_region
    _
  $region29: #{sonar_dnn.1} parent=0 // pred_fallthru
    _
  %v28 = vld [vmem:[%s1] sm:$0xff]
  %v29 = vld [vmem:[%s1 + $0x8] sm:$0xff]
  %v30 = vld [vmem:[%s1 + $0x10] sm:$0xff]
  %v31 = vld [vmem:[%s1 + $0x18] sm:$0xff]
  %v32 = vld [vmem:[%s1 + $0x20] sm:$0xff]
  %v33 = vld [vmem:[%s1 + $0x28] sm:$0xff]
  %v34 = vld [vmem:[%s1 + $0x30] sm:$0xff]
  %v35 = vld [vmem:[%s1 + $0x38] sm:$0xf]
  %v36 = vld [vmem:[%s0] sm:$0xff]
  %v37 = vld [vmem:[%s0 + $0x8] sm:$0xff]
  %v38 = vld [vmem:[%s0 + $0x10] sm:$0xff]
  %v39 = vld [vmem:[%s0 + $0x18] sm:$0xff]
  %v40 = vld [vmem:[%s0 + $0x20] sm:$0xff]
  %v41 = vld [vmem:[%s0 + $0x28] sm:$0xff]
  %v42 = vld [vmem:[%s0 + $0x30] sm:$0xff]
  %v43 = vld [vmem:[%s0 + $0x38] sm:$0xf]
  %v44 = vld [vmem:[%s2] sm:$0xff]
  %v45 = vld [vmem:[%s2 + $0x8] sm:$0xff]
  %v46 = vld [vmem:[%s2 + $0x10] sm:$0xff]
  %v47 = vld [vmem:[%s2 + $0x18] sm:$0xff]
  %v48 = vld [vmem:[%s2 + $0x20] sm:$0xff]
  %v49 = vld [vmem:[%s2 + $0x28] sm:$0xff]
  %v50 = vld [vmem:[%s2 + $0x30] sm:$0xff]
  %v51 = vld [vmem:[%s2 + $0x38] sm:$0xf]
  %53 = vset.pattern.permute.xlu0 0
  %54 = vperm.xlu0 %53, %v44
  %v55 = vpop.permute.xlu0 %54
  %58 = vset.pattern.permute.xlu0 0
  %59 = vperm.xlu0 %58, %v45
  %v60 = vpop.permute.xlu0 %59
  %63 = vset.pattern.permute.xlu0 0
  %64 = vperm.xlu0 %63, %v46
  %v65 = vpop.permute.xlu0 %64
  %68 = vset.pattern.permute.xlu0 0
  %69 = vperm.xlu0 %68, %v47
  %v70 = vpop.permute.xlu0 %69
  %73 = vset.pattern.permute.xlu0 0
  %74 = vperm.xlu0 %73, %v48
  %v75 = vpop.permute.xlu0 %74
  %78 = vset.pattern.permute.xlu0 0
  %79 = vperm.xlu0 %78, %v49
  %v80 = vpop.permute.xlu0 %79
  %83 = vset.pattern.permute.xlu0 0
  %84 = vperm.xlu0 %83, %v50
  %v85 = vpop.permute.xlu0 %84
  %88 = vset.pattern.permute.xlu0 0
  %89 = vperm.xlu0 %88, %v51
  %v90 = vpop.permute.xlu0 %89
  %vm92 = vcmask 490496
  %v94 = vsel %vm92, %v28, 0
  %v97 = vsel %vm92, %v29, 0
  %v100 = vsel %vm92, %v30, 0
  %v103 = vsel %vm92, %v31, 0
  %v106 = vsel %vm92, %v32, 0
  %v109 = vsel %vm92, %v33, 0
  %v112 = vsel %vm92, %v34, 0
  %v115 = vsel %vm92, %v35, 0
  %vm117 = vcmask 1043456
  %v119 = vsel %vm117, %v43, 0
  %121 = vmatprep.subr.mxu0 0.0
  %122 = vmatpush1.msra.mxu0 %v36
  %123 = vmatprep.subr.mxu0 0.0
  %124 = vmatpush1.msra.mxu0 %v37
  %125 = vmatprep.subr.mxu0 0.0
  %126 = vmatpush1.msra.mxu0 %v38
  %127 = vmatprep.subr.mxu0 0.0
  %128 = vmatpush1.msra.mxu0 %v39
  %129 = vmatprep.subr.mxu0 0.0
  %130 = vmatpush1.msra.mxu0 %v40
  %131 = vmatprep.subr.mxu0 0.0
  %132 = vmatpush1.msra.mxu0 %v41
  %133 = vmatprep.subr.mxu0 0.0
  %134 = vmatpush1.msra.mxu0 %v42
  %135 = vmatprep.subr.mxu0 0.0
  %136 = vmatpush1.msra.mxu0 %v119
  %137 = vmatprep.subr.mxu0 0.0
  %138 = vmatpush1.msra.mxu0 0.0
  %139 = vmatprep.subr.mxu0 0.0
  %140 = vmatpush1.msra.mxu0 0.0
  %141 = vmatprep.subr.mxu0 0.0
  %142 = vmatpush1.msra.mxu0 0.0
  %143 = vmatprep.subr.mxu0 0.0
  %144 = vmatpush1.msra.mxu0 0.0
  %145 = vmatprep.subr.mxu0 0.0
  %146 = vmatpush1.msra.mxu0 0.0
  %147 = vmatprep.subr.mxu0 0.0
  %148 = vmatpush1.msra.mxu0 0.0
  %149 = vmatprep.subr.mxu0 0.0
  %150 = vmatpush1.msra.mxu0 0.0
  %151 = vmatprep.subr.mxu0 0.0
  %152 = vmatpush1.msra.mxu0 0.0
  %153 = vmatprep.subr.mxu0 0.0
  %154 = vmatpush1.msra.mxu0 0.0
  %155 = vmatprep.subr.mxu0 0.0
  %156 = vmatpush1.msra.mxu0 0.0
  %157 = vmatprep.subr.mxu0 0.0
  %158 = vmatpush1.msra.mxu0 0.0
  %159 = vmatprep.subr.mxu0 0.0
  %160 = vmatpush1.msra.mxu0 0.0
  %161 = vmatprep.subr.mxu0 0.0
  %162 = vmatpush1.msra.mxu0 0.0
  %163 = vmatprep.subr.mxu0 0.0
  %164 = vmatpush1.msra.mxu0 0.0
  %165 = vmatprep.subr.mxu0 0.0
  %166 = vmatpush1.msra.mxu0 0.0
  %167 = vmatprep.subr.mxu0 0.0
  %168 = vmatpush1.msra.mxu0 0.0
  %169 = vmatprep.subr.mxu0 0.0
  %170 = vmatpush1.msra.mxu0 0.0
  %171 = vmatprep.subr.mxu0 0.0
  %172 = vmatpush1.msra.mxu0 0.0
  %173 = vmatprep.subr.mxu0 0.0
  %174 = vmatpush1.msra.mxu0 0.0
  %175 = vmatprep.subr.mxu0 0.0
  %176 = vmatpush1.msra.mxu0 0.0
  %177 = vmatprep.subr.mxu0 0.0
  %178 = vmatpush1.msra.mxu0 0.0
  %179 = vmatprep.subr.mxu0 0.0
  %180 = vmatpush1.msra.mxu0 0.0
  %181 = vmatprep.subr.mxu0 0.0
  %182 = vmatpush1.msra.mxu0 0.0
  %183 = vmatprep.subr.mxu0 0.0
  %184 = vmatpush1.msra.mxu0 0.0
  %185 = vmatprep.mubr.f32.mxu0 0.0
  %186 = vmatmul.mubr.f32.gmra.mrb[0].mxu0 %v94
  %v187 = vpop.f32.mrb[0].mxu0
  %v188 = vadd.f32 %v55, %v187
  %v189 = vpop.f32.mrb[0].mxu0
  %190 = vmatprep.mubr.f32.mxu0 0.0
  %191 = vmatmul.mubr.f32.gmra.mrb[0].mxu0 %v97
  %v192 = vpop.f32.mrb[0].mxu0
  %v193 = vadd.f32 %v60, %v192
  %v194 = vpop.f32.mrb[0].mxu0
  %195 = vmatprep.mubr.f32.mxu0 0.0
  %196 = vmatmul.mubr.f32.gmra.mrb[0].mxu0 %v100
  %v197 = vpop.f32.mrb[0].mxu0
  %v198 = vadd.f32 %v65, %v197
  %v199 = vpop.f32.mrb[0].mxu0
  %200 = vmatprep.mubr.f32.mxu0 0.0
  %201 = vmatmul.mubr.f32.gmra.mrb[0].mxu0 %v103
  %v202 = vpop.f32.mrb[0].mxu0
  %v203 = vadd.f32 %v70, %v202
  %v204 = vpop.f32.mrb[0].mxu0
  %205 = vmatprep.mubr.f32.mxu0 0.0
  %206 = vmatmul.mubr.f32.gmra.mrb[0].mxu0 %v106
  %v207 = vpop.f32.mrb[0].mxu0
  %v208 = vadd.f32 %v75, %v207
  %v209 = vpop.f32.mrb[0].mxu0
  %210 = vmatprep.mubr.f32.mxu0 0.0
  %211 = vmatmul.mubr.f32.gmra.mrb[0].mxu0 %v109
  %v212 = vpop.f32.mrb[0].mxu0
  %v213 = vadd.f32 %v80, %v212
  %v214 = vpop.f32.mrb[0].mxu0
  %215 = vmatprep.mubr.f32.mxu0 0.0
  %216 = vmatmul.mubr.f32.gmra.mrb[0].mxu0 %v112
  %v217 = vpop.f32.mrb[0].mxu0
  %v218 = vadd.f32 %v85, %v217
  %v219 = vpop.f32.mrb[0].mxu0
  %220 = vmatprep.mubr.f32.mxu0 0.0
  %221 = vmatmul.mubr.f32.gmra.mrb[0].mxu0 %v115
  %v222 = vpop.f32.mrb[0].mxu0
  %v223 = vadd.f32 %v90, %v222
  %v224 = vpop.f32.mrb[0].mxu0
  %225 = vdwg.mxu0
  %v226 = vmax.f32 %v188, 0.0
  %v227 = vmax.f32 %v193, 0.0
  %v228 = vmax.f32 %v198, 0.0
  %v229 = vmax.f32 %v203, 0.0
  %v230 = vmax.f32 %v208, 0.0
  %v231 = vmax.f32 %v213, 0.0
  %v232 = vmax.f32 %v218, 0.0
  %v233 = vmax.f32 %v223, 0.0
  %v234 = vld [vmem:[%s3] sm:$0xff]
  %v235 = vld [vmem:[%s3 + $0x8] sm:$0xff]
  %v236 = vld [vmem:[%s3 + $0x10] sm:$0xff]
  %v237 = vld [vmem:[%s3 + $0x18] sm:$0x3f]
  %v238 = vld [vmem:[%s4] sm:$0xff]
  %v239 = vld [vmem:[%s4 + $0x8] sm:$0xff]
  %v240 = vld [vmem:[%s4 + $0x10] sm:$0xff]
  %v241 = vld [vmem:[%s4 + $0x18] sm:$0x3f]
  %243 = vset.pattern.permute.xlu0 0
  %244 = vperm.xlu0 %243, %v238
  %v245 = vpop.permute.xlu0 %244
  %248 = vset.pattern.permute.xlu0 0
  %249 = vperm.xlu0 %248, %v239
  %v250 = vpop.permute.xlu0 %249
  %253 = vset.pattern.permute.xlu0 0
  %254 = vperm.xlu0 %253, %v240
  %v255 = vpop.permute.xlu0 %254
  %258 = vset.pattern.permute.xlu0 0
  %259 = vperm.xlu0 %258, %v241
  %v260 = vpop.permute.xlu0 %259
  %v263 = vsel %vm92, %v234, 0
  %v266 = vsel %vm92, %v235, 0
  %v269 = vsel %vm92, %v236, 0
  %v272 = vsel %vm92, %v237, 0
  %v275 = vsel %vm117, %v233, 0
  %277 = vmatprep.subr.mxu0 0.0
  %278 = vmatpush1.msra.mxu0 %v226
  %279 = vmatprep.subr.mxu0 0.0
  %280 = vmatpush1.msra.mxu0 %v227
  %281 = vmatprep.subr.mxu0 0.0
  %282 = vmatpush1.msra.mxu0 %v228
  %283 = vmatprep.subr.mxu0 0.0
  %284 = vmatpush1.msra.mxu0 %v229
  %285 = vmatprep.subr.mxu0 0.0
  %286 = vmatpush1.msra.mxu0 %v230
  %287 = vmatprep.subr.mxu0 0.0
  %288 = vmatpush1.msra.mxu0 %v231
  %289 = vmatprep.subr.mxu0 0.0
  %290 = vmatpush1.msra.mxu0 %v232
  %291 = vmatprep.subr.mxu0 0.0
  %292 = vmatpush1.msra.mxu0 %v275
  %293 = vmatprep.subr.mxu0 0.0
  %294 = vmatpush1.msra.mxu0 0.0
  %295 = vmatprep.subr.mxu0 0.0
  %296 = vmatpush1.msra.mxu0 0.0
  %297 = vmatprep.subr.mxu0 0.0
  %298 = vmatpush1.msra.mxu0 0.0
  %299 = vmatprep.subr.mxu0 0.0
  %300 = vmatpush1.msra.mxu0 0.0
  %301 = vmatprep.subr.mxu0 0.0
  %302 = vmatpush1.msra.mxu0 0.0
  %303 = vmatprep.subr.mxu0 0.0
  %304 = vmatpush1.msra.mxu0 0.0
  %305 = vmatprep.subr.mxu0 0.0
  %306 = vmatpush1.msra.mxu0 0.0
  %307 = vmatprep.subr.mxu0 0.0
  %308 = vmatpush1.msra.mxu0 0.0
  %309 = vmatprep.subr.mxu0 0.0
  %310 = vmatpush1.msra.mxu0 0.0
  %311 = vmatprep.subr.mxu0 0.0
  %312 = vmatpush1.msra.mxu0 0.0
  %313 = vmatprep.subr.mxu0 0.0
  %314 = vmatpush1.msra.mxu0 0.0
  %315 = vmatprep.subr.mxu0 0.0
  %316 = vmatpush1.msra.mxu0 0.0
  %317 = vmatprep.subr.mxu0 0.0
  %318 = vmatpush1.msra.mxu0 0.0
  %319 = vmatprep.subr.mxu0 0.0
  %320 = vmatpush1.msra.mxu0 0.0
  %321 = vmatprep.subr.mxu0 0.0
  %322 = vmatpush1.msra.mxu0 0.0
  %323 = vmatprep.subr.mxu0 0.0
  %324 = vmatpush1.msra.mxu0 0.0
  %325 = vmatprep.subr.mxu0 0.0
  %326 = vmatpush1.msra.mxu0 0.0
  %327 = vmatprep.subr.mxu0 0.0
  %328 = vmatpush1.msra.mxu0 0.0
  %329 = vmatprep.subr.mxu0 0.0
  %330 = vmatpush1.msra.mxu0 0.0
  %331 = vmatprep.subr.mxu0 0.0
  %332 = vmatpush1.msra.mxu0 0.0
  %333 = vmatprep.subr.mxu0 0.0
  %334 = vmatpush1.msra.mxu0 0.0
  %335 = vmatprep.subr.mxu0 0.0
  %336 = vmatpush1.msra.mxu0 0.0
  %337 = vmatprep.subr.mxu0 0.0
  %338 = vmatpush1.msra.mxu0 0.0
  %339 = vmatprep.subr.mxu0 0.0
  %340 = vmatpush1.msra.mxu0 0.0
  %341 = vmatprep.mubr.f32.mxu0 0.0
  %342 = vmatmul.mubr.f32.gmra.mrb[0].mxu0 %v263
  %v343 = vpop.f32.mrb[0].mxu0
  %v344 = vadd.f32 %v245, %v343
  %v345 = vpop.f32.mrb[0].mxu0
  %346 = vmatprep.mubr.f32.mxu0 0.0
  %347 = vmatmul.mubr.f32.gmra.mrb[0].mxu0 %v266
  %v348 = vpop.f32.mrb[0].mxu0
  %v349 = vadd.f32 %v250, %v348
  %v350 = vpop.f32.mrb[0].mxu0
  %351 = vmatprep.mubr.f32.mxu0 0.0
  %352 = vmatmul.mubr.f32.gmra.mrb[0].mxu0 %v269
  %v353 = vpop.f32.mrb[0].mxu0
  %v354 = vadd.f32 %v255, %v353
  %v355 = vpop.f32.mrb[0].mxu0
  %356 = vmatprep.mubr.f32.mxu0 0.0
  %357 = vmatmul.mubr.f32.gmra.mrb[0].mxu0 %v272
  %v358 = vpop.f32.mrb[0].mxu0
  %v359 = vadd.f32 %v260, %v358
  %v360 = vpop.f32.mrb[0].mxu0
  %361 = vdwg.mxu0
  %v362 = vmax.f32 %v344, 0.0
  %v363 = vmax.f32 %v349, 0.0
  %v364 = vmax.f32 %v354, 0.0
  %v365 = vmax.f32 %v359, 0.0
  %v366 = vld [vmem:[%s5] sm:$0x1]
  %v367 = vld [vmem:[#allocation2] sm:$0x1]
  %369 = vset.pattern.permute.xlu0 0
  %370 = vperm.xlu0 %369, %v367
  %v371 = vpop.permute.xlu0 %370
  %v373 = vlaneseq
  %v374 = vshrl.u32 %v373, 7
  %v375 = vsub.s32 0, %v374
  %v376 = vrot.slane %v371, %v375
  %vm377 = vcmask 244736
  %v379 = vsel %vm377, %v366, 0
  %vm381 = vcmask 1045504
  %v383 = vsel %vm381, %v365, 0
  %385 = vmatprep.subr.mxu0 0.0
  %386 = vmatpush1.msra.mxu0 %v362
  %387 = vmatprep.subr.mxu0 0.0
  %388 = vmatpush1.msra.mxu0 %v363
  %389 = vmatprep.subr.mxu0 0.0
  %390 = vmatpush1.msra.mxu0 %v364
  %391 = vmatprep.subr.mxu0 0.0
  %392 = vmatpush1.msra.mxu0 %v383
  %393 = vmatprep.subr.mxu0 0.0
  %394 = vmatpush1.msra.mxu0 0.0
  %395 = vmatprep.subr.mxu0 0.0
  %396 = vmatpush1.msra.mxu0 0.0
  %397 = vmatprep.subr.mxu0 0.0
  %398 = vmatpush1.msra.mxu0 0.0
  %399 = vmatprep.subr.mxu0 0.0
  %400 = vmatpush1.msra.mxu0 0.0
  %401 = vmatprep.subr.mxu0 0.0
  %402 = vmatpush1.msra.mxu0 0.0
  %403 = vmatprep.subr.mxu0 0.0
  %404 = vmatpush1.msra.mxu0 0.0
  %405 = vmatprep.subr.mxu0 0.0
  %406 = vmatpush1.msra.mxu0 0.0
  %407 = vmatprep.subr.mxu0 0.0
  %408 = vmatpush1.msra.mxu0 0.0
  %409 = vmatprep.subr.mxu0 0.0
  %410 = vmatpush1.msra.mxu0 0.0
  %411 = vmatprep.subr.mxu0 0.0
  %412 = vmatpush1.msra.mxu0 0.0
  %413 = vmatprep.subr.mxu0 0.0
  %414 = vmatpush1.msra.mxu0 0.0
  %415 = vmatprep.subr.mxu0 0.0
  %416 = vmatpush1.msra.mxu0 0.0
  %417 = vmatprep.subr.mxu0 0.0
  %418 = vmatpush1.msra.mxu0 0.0
  %419 = vmatprep.subr.mxu0 0.0
  %420 = vmatpush1.msra.mxu0 0.0
  %421 = vmatprep.subr.mxu0 0.0
  %422 = vmatpush1.msra.mxu0 0.0
  %423 = vmatprep.subr.mxu0 0.0
  %424 = vmatpush1.msra.mxu0 0.0
  %425 = vmatprep.subr.mxu0 0.0
  %426 = vmatpush1.msra.mxu0 0.0
  %427 = vmatprep.subr.mxu0 0.0
  %428 = vmatpush1.msra.mxu0 0.0
  %429 = vmatprep.subr.mxu0 0.0
  %430 = vmatpush1.msra.mxu0 0.0
  %431 = vmatprep.subr.mxu0 0.0
  %432 = vmatpush1.msra.mxu0 0.0
  %433 = vmatprep.subr.mxu0 0.0
  %434 = vmatpush1.msra.mxu0 0.0
  %435 = vmatprep.subr.mxu0 0.0
  %436 = vmatpush1.msra.mxu0 0.0
  %437 = vmatprep.subr.mxu0 0.0
  %438 = vmatpush1.msra.mxu0 0.0
  %439 = vmatprep.subr.mxu0 0.0
  %440 = vmatpush1.msra.mxu0 0.0
  %441 = vmatprep.subr.mxu0 0.0
  %442 = vmatpush1.msra.mxu0 0.0
  %443 = vmatprep.subr.mxu0 0.0
  %444 = vmatpush1.msra.mxu0 0.0
  %445 = vmatprep.subr.mxu0 0.0
  %446 = vmatpush1.msra.mxu0 0.0
  %447 = vmatprep.subr.mxu0 0.0
  %448 = vmatpush1.msra.mxu0 0.0
  %449 = vmatprep.mubr.f32.mxu0 0.0
  %450 = vmatmul.mubr.f32.gmra.mrb[0].mxu0 %v379
  %v451 = vpop.f32.mrb[0].mxu0
  %v452 = vadd.f32 %v376, %v451
  %v453 = vpop.f32.mrb[0].mxu0
  %454 = vdwg.mxu0
  %v455 = vxor.u32 %v452, 2147483648
  %v456 = vmul.f32 %v455, 1.442695
  %v457 = vpow.pop %v456
  %v458 = vadd.f32 %v457, 1.0
  %v459 = vrcp.pop %v458
  %v460 = vmul.f32 1.0, %v459
  %461 = vst [vmem:[%s7] sm:$0x1] %v460
  // Predicated region
  $region30: #{sonar_dnn.1} parent=0 // pred_check
    _
  $region31: #{sonar_dnn.1} parent=0 // pred_check_branch
    %463 = sbr.rel (0) target = $region33
  $region32: #{sonar_dnn.1} parent=0 // pred_region
    _
  $region33: #{sonar_dnn.1} parent=0 // pred_fallthru
    _
  // Predicated region
  $region34: #{sonar_dnn.1} parent=0 // pred_check
    _
  $region35: #{sonar_dnn.1} parent=0 // pred_check_branch
    %465 = sbr.rel (0) target = $region37
  $region36: #{sonar_dnn.1} parent=0 // pred_region
    _
  $region37: #{sonar_dnn.1} parent=0 // pred_fallthru
    _

</llo_original>
